<compile_context>
chip_gen: v5e
topology: v5e:2x2
jax: 0.10.0
libtpu: 0.0.40
codegen_flags: <defaults>
</compile_context>

<pallas_src>
import functools
import math

import jax
import jax.numpy as jnp
from jax.experimental import pallas as pl
from jax.experimental.pallas import tpu as pltpu

_LANE = 128
_SUBLANE_Q = {1: 32, 2: 16, 4: 8}   # itemsize -> sublane packing quantum


def _film_kernel(gb_ref, x_ref, o_ref):
    """out = gamma * x + beta  (streaming broadcast FMA, f32 accumulate).

    gb_ref : (1, 2, W) f32   row 0 = gamma, row 1 = beta (per batch, lane-dense)
    x_ref  : (1, R, W)       row tile of the features
    o_ref  : (1, R, W)       row tile of the output
    """
    g = gb_ref[:, 0:1, :]                          # (1, 1, W) f32
    b = gb_ref[:, 1:2, :]                          # (1, 1, W) f32
    x = x_ref[...].astype(jnp.float32)             # FMA in f32, cast on store
    o_ref[...] = (x * g + b).astype(o_ref.dtype)


@functools.lru_cache(maxsize=1)
def _chip_profile():
    """Per-generation tile target / scoped-VMEM limit / minimum grid steps."""
    kind = ""
    try:
        kind = jax.devices()[0].device_kind.lower()
    except Exception:
        pass
    if "v7" in kind or "7x" in kind:
        # 64 MiB VMEM per TC, 2 TCs: 4 x 8 MiB double-buffered tiles = 32 MiB
        # under a 48 MiB limit; ensure >= 8 grid steps so both TCs get work.
        return dict(target_tile=8 << 20, vmem_limit=48 << 20, min_steps=8)
    if "v6" in kind:
        return dict(target_tile=12 << 20, vmem_limit=96 << 20, min_steps=1)
    if "v5" in kind:
        return dict(target_tile=4 << 20, vmem_limit=64 << 20, min_steps=1)
    # Unknown chip: conservative numbers legal everywhere (incl. 64 MiB v7x).
    return dict(target_tile=4 << 20, vmem_limit=48 << 20, min_steps=2)


def _lane_layout(T, C, max_lanes=1024):
    """Pick a lane-dense (rows, W) view of (T, C).  Returns (rows, W, rep)."""
    if C % _LANE == 0:
        return T, C, 1
    W = math.lcm(C, _LANE)
    if W <= max_lanes and (T * C) % W == 0:
        return (T * C) // W, W, W // C
    # TODO(synk): pad T to make (T*C) % lcm == 0 instead of masked stores.
    return T, C, 1            # fallback: C on the lane axis (masked stores)


def _pick_rows_tile(rows, bytes_per_row, target_tile_bytes, sub_q, min_steps, batch):
    """Fixed large tile (multiple of sub_q); grid uses cdiv so no divisor rule."""
    tile = max(1, target_tile_bytes // max(1, bytes_per_row))
    tile = max(sub_q, (tile // sub_q) * sub_q)
    if min_steps > 1:                                     # v7x: feed both TCs
        steps_needed = -(-min_steps // max(1, batch))
        if steps_needed > 1:
            cap = -(-rows // steps_needed)                # ceil
            cap = max(sub_q, -(-cap // sub_q) * sub_q)    # round up to quantum
            tile = min(tile, cap)
    if tile >= rows:
        tile = rows           # full extent: always layout-legal, single step
    return tile


def film_pallas(x, cond, wg_t, bg, wb_t, bb, *,
                target_tile_bytes=None, min_pallas_bytes=1 << 20,
                force_pallas=False):
    """FiLM forward.

    x    : (B, T, C)  features
    cond : (B, D)     conditioning vectors
    wg_t : (D, C)     gamma Linear weight, pre-transposed
    bg   : (C,)       gamma Linear bias
    wb_t : (D, C)     beta Linear weight, pre-transposed
    bb   : (C,)       beta Linear bias
    """
    B, T, C = x.shape
    elem = jnp.dtype(x.dtype).itemsize

    # ---- gamma/beta once, one batched XLA matmul (MXU); kept in f32. ----
    cond_f = cond.astype(jnp.float32)
    gamma = cond_f @ wg_t.astype(jnp.float32) + bg.astype(jnp.float32)   # (B, C)
    beta = cond_f @ wb_t.astype(jnp.float32) + bb.astype(jnp.float32)    # (B, C)

    # ---- tiny inputs: pallas_call launch overhead dominates; let XLA fuse. ----
    if not force_pallas and x.size * elem < min_pallas_bytes:
        out = gamma[:, None, :] * x.astype(jnp.float32) + beta[:, None, :]
        return out.astype(x.dtype)

    prof = _chip_profile()
    if target_tile_bytes is None:
        target_tile_bytes = prof["target_tile"]

    # ---- lane-dense repack of x; tile gamma/beta to width W; pack into one. ----
    rows, W, rep = _lane_layout(T, C)
    x_r = x.reshape(B, rows, W)
    if rep > 1:
        gamma = jnp.tile(gamma, (1, rep))    # gamma[b, w] == gamma[b, w % C]
        beta = jnp.tile(beta, (1, rep))
    gb = jnp.stack([gamma, beta], axis=1)    # (B, 2, W) f32, one resident block

    # ---- row-tile selection: big fixed tile + cdiv grid (ragged tail OK). ----
    sub_q = _SUBLANE_Q.get(elem, 8)
    rows_tile = _pick_rows_tile(rows, W * elem, target_tile_bytes, sub_q,
                                prof["min_steps"], B)
    grid = (B, pl.cdiv(rows, rows_tile))

    cost = pl.CostEstimate(
        flops=2 * B * rows * W,                       # one mul + one add / elem
        transcendentals=0,
        bytes_accessed=2 * B * rows * W * elem + B * 2 * W * 4,
    )

    out = pl.pallas_call(
        _film_kernel,
        out_shape=jax.ShapeDtypeStruct((B, rows, W), x.dtype),
        grid_spec=pltpu.PrefetchScalarGridSpec(
            num_scalar_prefetch=0,
            grid=grid,
            in_specs=[
                pl.BlockSpec((1, 2, W), lambda b, t: (b, 0, 0)),          # gamma+beta
                pl.BlockSpec((1, rows_tile, W), lambda b, t: (b, t, 0)),  # x tile
            ],
            out_specs=pl.BlockSpec((1, rows_tile, W), lambda b, t: (b, t, 0)),
        ),
        compiler_params=pltpu.CompilerParams(
            dimension_semantics=("parallel", "parallel"),
            vmem_limit_bytes=prof["vmem_limit"],
        ),
        cost_estimate=cost,
    )(gb, x_r)

    return out.reshape(B, T, C)


def film_reference(x, cond, wg_t, bg, wb_t, bb):
    gamma = cond.astype(jnp.float32) @ wg_t + bg                  # (B, C)
    beta = cond.astype(jnp.float32) @ wb_t + bb                   # (B, C)
    return (gamma[:, None, :] * x.astype(jnp.float32)
            + beta[:, None, :]).astype(x.dtype)


def _make_inputs(key, B, T, C, D, dtype=jnp.float32):
    k_x, k_c, k_wg, k_bg, k_wb, k_bb = jax.random.split(key, 6)
    x = jax.random.normal(k_x, (B, T, C), dtype=dtype)
    cond = jax.random.normal(k_c, (B, D), dtype=dtype)
    bound = 1.0 / math.sqrt(D)                       # PyTorch Linear init bound
    wg_t = jax.random.uniform(k_wg, (D, C), jnp.float32, -bound, bound)  # Wg^T
    bg = jax.random.uniform(k_bg, (C,), jnp.float32, -bound, bound)
    wb_t = jax.random.uniform(k_wb, (D, C), jnp.float32, -bound, bound)  # Wb^T
    bb = jax.random.uniform(k_bb, (C,), jnp.float32, -bound, bound)
    return x, cond, wg_t, bg, wb_t, bb


if __name__ == "__main__":
    # 1) Small shape consistent with the module's forward (B, T_x, C), (B, D).
    args_small = _make_inputs(jax.random.PRNGKey(0), B=2, T=8, C=32, D=16)
    out_small = jax.block_until_ready(
        film_pallas(*args_small, force_pallas=True))        # exercise Pallas path
    ref_small = film_reference(*args_small)
    assert out_small.shape == (2, 8, 32)
    assert jnp.allclose(out_small, ref_small, atol=1e-5, rtol=1e-5), \
        "pallas path mismatch vs reference"

    # Default (bypass-for-tiny) path must agree too.
    out_bypass = jax.block_until_ready(film_pallas(*args_small))
    assert jnp.allclose(out_bypass, ref_small, atol=1e-5, rtol=1e-5), \
        "bypass path mismatch vs reference"

    # 2) Non-power-of-two C -> lcm(96,128)=384 lane repack; small explicit tile
    #    target to exercise the cdiv grid with a ragged last row-tile.
    args_lcm = _make_inputs(jax.random.PRNGKey(1), B=2, T=3900, C=96, D=48)
    out_lcm = jax.block_until_ready(
        film_pallas(*args_lcm, target_tile_bytes=64 << 10))
    ref_lcm = film_reference(*args_lcm)
    assert jnp.allclose(out_lcm, ref_lcm, atol=1e-5, rtol=1e-5), \
        "lcm/ragged-tile path mismatch vs reference"

    print("KERNEL_OK")
</pallas_src>

<mosaic_0001>
module attributes {stable_mosaic.version = 11 : i64} {
  func.func @_film_kernel(%arg0: i32, %arg1: i32, %arg2: memref<1x2x128xf32, #tpu.memory_space<vmem>>, %arg3: memref<1x2x128xf32, #tpu.memory_space<vmem>>, %arg4: memref<1x2x128xf32, #tpu.memory_space<vmem>>) attributes {dimension_semantics = [#tpu.dimension_semantics<parallel>, #tpu.dimension_semantics<parallel>], iteration_bounds = array<i64: 2, 1>, scalar_prefetch = 0 : i64, scratch_operands = 0 : i64, tpu.core_type = #tpu.core_type<tc>, window_params = [{transform_indices = @transform_0, window_bounds = array<i64: 1, 2, 128>}, {transform_indices = @transform_1, window_bounds = array<i64: 1, 2, 128>}, {transform_indices = @transform_2, window_bounds = array<i64: 1, 2, 128>}]} {
    %c0 = arith.constant 0 : index
    %c0_0 = arith.constant 0 : index
    %c0_1 = arith.constant 0 : index
    %0 = vector.load %arg2[%c0, %c0_0, %c0_1] : memref<1x2x128xf32, #tpu.memory_space<vmem>>, vector<1x1x128xf32>
    %c0_2 = arith.constant 0 : index
    %c1 = arith.constant 1 : index
    %c0_3 = arith.constant 0 : index
    %1 = vector.load %arg2[%c0_2, %c1, %c0_3] : memref<1x2x128xf32, #tpu.memory_space<vmem>>, vector<1x1x128xf32>
    %c0_4 = arith.constant 0 : index
    %c0_5 = arith.constant 0 : index
    %c0_6 = arith.constant 0 : index
    %2 = vector.load %arg3[%c0_4, %c0_5, %c0_6] : memref<1x2x128xf32, #tpu.memory_space<vmem>>, vector<1x2x128xf32>
    %3 = vector.broadcast %0 : vector<1x1x128xf32> to vector<1x2x128xf32>
    %4 = arith.mulf %2, %3 : vector<1x2x128xf32>
    %5 = vector.broadcast %1 : vector<1x1x128xf32> to vector<1x2x128xf32>
    %6 = arith.addf %4, %5 : vector<1x2x128xf32>
    %c0_7 = arith.constant 0 : index
    %c0_8 = arith.constant 0 : index
    %c0_9 = arith.constant 0 : index
    %7 = vector.load %arg4[%c0_7, %c0_8, %c0_9] : memref<1x2x128xf32, #tpu.memory_space<vmem>>, vector<1x2x128xf32>
    tpu.vector_store %arg4[%c0_7, %c0_8, %c0_9], %6 {strides = array<i32>} : memref<1x2x128xf32, #tpu.memory_space<vmem>>, vector<1x2x128xf32>,
    return
  }
  func.func @transform_0(%arg0: i32, %arg1: i32) -> (i32, i32, i32) {
    %c0_i32 = arith.constant 0 : i32
    %c0_i32_0 = arith.constant 0 : i32
    %c0_i32_1 = arith.constant 0 : i32
    return %arg0, %c0_i32, %c0_i32_0 : i32, i32, i32
  }
  func.func @transform_1(%arg0: i32, %arg1: i32) -> (i32, i32, i32) {
    %c0_i32 = arith.constant 0 : i32
    %c0_i32_0 = arith.constant 0 : i32
    return %arg0, %arg1, %c0_i32 : i32, i32, i32
  }
  func.func @transform_2(%arg0: i32, %arg1: i32) -> (i32, i32, i32) {
    %c0_i32 = arith.constant 0 : i32
    %c0_i32_0 = arith.constant 0 : i32
    return %arg0, %arg1, %c0_i32 : i32, i32, i32
  }
}

</mosaic_0001>

<llo_original>
// kernel: tpu_custom_call.1
$region0: #{tpu_custom_call.1}
  #allocation0 [shape = 'u32[]', space=smem, size = 0x4, offset = 0x4, fixed_abs, tag = 'smem constant byte address 0x4 - core index']
  #allocation1 [shape = 'u32[72,128]{1,0:T(1,128)}', space=vmem, size = 0x9000, scoped, tag = 'internal scratch']
  %s0 = inlined_call_operand.hbm [shape: f32[2,2,128], index: 0, kind: input, shape index: {}]
  %s1 = inlined_call_operand.hbm [shape: f32[2,2,128], index: 1, kind: input, shape index: {}]
  %s2 = inlined_call_operand.hbm [shape: f32[2,2,128], index: 2, kind: output, shape index: {}]
  %s3 = sld [smem:[#allocation0]]
  $region49: #{tpu_custom_call.1} parent=0
    _
  %s5 = ssub.s32 1, %s3
  %s6 = scalar_select 0, %s5, %s3
  $region1: #{tpu_custom_call.1} parent=0
    #allocation2 [shape = 'u8[2048]{0}', space=vmem, size = 0x800, scoped, tag = 'input window, operand 0']
    #allocation3 [shape = 's32[2]{0}', space=sflag, size = 0x8, scoped, tag = 'scoped memory for tpu_custom_call.1']
    #allocation4 [shape = 's32[2]{0}', space=sflag, size = 0x8, scoped, tag = 'scoped memory for tpu_custom_call.1']
    #allocation5 [shape = 'u8[2048]{0}', space=vmem, size = 0x800, scoped, tag = 'input window, operand 1']
    #allocation6 [shape = 's32[2]{0}', space=sflag, size = 0x8, scoped, tag = 'scoped memory for tpu_custom_call.1']
    #allocation7 [shape = 'u8[2048]{0}', space=vmem, size = 0x800, scoped, tag = 'output window, operand 0']
    %7 = vsyncpa [#allocation3], 0
    %s8 = scalar_lea.sflag [#allocation3], 1
    %9 = vsyncpa %s8, 0
    %10 = vsyncpa [#allocation6], 0
    %s11 = scalar_lea.sflag [#allocation6], 1
    %12 = vsyncpa %s11, 0
    %13 = vsyncpa [#allocation4], 0
    %s14 = scalar_lea.sflag [#allocation4], 1
    %15 = vsyncpa %s14, 0
    loop: start=0, step=1, limit=4
    $region2: #{tpu_custom_call.1} parent=1 // loop_pre_header
      _
    $region3: #{tpu_custom_call.1} parent=1 // loop_header
      %s17 = sphi 0, %s21
      %p18 = scmp.ge.s32.totalorder %s17, 4
      %s24 = sphi 0, %s36
      %s25 = sphi 0, %s32
      %s26 = sphi 0, %s24
      %s27 = sphi 0, %s25
      %s28 = sphi 0, %s26
      %s29 = sphi 0, %s27
      %s39 = sphi 0, %s41
      %s42 = sphi 0, %s39
      %s43 = sphi 0, %s42
      %s59 = sphi 0, %s43
      %s67 = sphi 0, %s69
      %s70 = sphi 0, %s67
      %s71 = sphi 0, %s70
      %s87 = sphi 0, %s71
      %s95 = sphi 0, %s97
      %s98 = sphi 0, %s95
      %s99 = sphi 0, %s98
      %s115 = sphi 0, %s99
    $region4: #{tpu_custom_call.1} parent=1 // loop_header_branch
      %20 = sbr.rel (%p18) target = $region8
    $region5: #{tpu_custom_call.1} parent=1 // loop_body
      %s22 = ssub.s32 %s17, 1
      %s23 = ssub.s32 %s17, 2
      %s30 = sadd.s32 1, %s25
      %p31 = scmp.ge.s32.totalorder %s30, 1
      %s32 = scalar_select %p31, 0, %s30
      %s33 = sadd.s32 1, %s24
      %s34 = scalar_select %p31, %s33, %s24
      %p35 = scmp.ge.s32.totalorder %s34, 2
      %s36 = scalar_select %p35, 0, %s34
      %s37 = ssub.s32 %s24, %s36
      %p38 = scmp.eq.s32.totalorder %s37, 0
      %s40 = sadd.s32 %s39, 1
      %s41 = scalar_select %p38, %s39, %s40
      %p44 = pneg %p38
      %p45 = scmp.eq.s32.totalorder %s17, 1
      %p46 = por %p44, %p45
      %p47 = scmp.ne.s32.totalorder %s39, %s42
      %p48 = scmp.eq.s32.totalorder %s17, 0
      %p49 = por %p47, %p48
      %p50 = scmp.ne.s32.totalorder %s39, %s42
      %p51 = scmp.eq.s32.totalorder %s22, 1
      %p52 = por %p50, %p51
      %p53 = scmp.ne.s32.totalorder %s42, %s43
      %p54 = scmp.eq.s32.totalorder %s22, 0
      %p55 = por %p53, %p54
      %p56 = scmp.ne.s32.totalorder %s42, %s43
      %p57 = scmp.eq.s32.totalorder %s23, 1
      %p58 = por %p56, %p57
      %p60 = scmp.ne.s32.totalorder %s43, %s59
      %p61 = scmp.eq.s32.totalorder %s23, 0
      %p62 = por %p60, %p61
      %s63 = ssub.s32 %s24, %s36
      %s64 = ssub.s32 %s25, %s32
      %s65 = sor.u32 %s63, %s64
      %p66 = scmp.eq.s32.totalorder %s65, 0
      %s68 = sadd.s32 %s67, 1
      %s69 = scalar_select %p66, %s67, %s68
      %p72 = pneg %p66
      %p73 = scmp.eq.s32.totalorder %s17, 1
      %p74 = por %p72, %p73
      %p75 = scmp.ne.s32.totalorder %s67, %s70
      %p76 = scmp.eq.s32.totalorder %s17, 0
      %p77 = por %p75, %p76
      %p78 = scmp.ne.s32.totalorder %s67, %s70
      %p79 = scmp.eq.s32.totalorder %s22, 1
      %p80 = por %p78, %p79
      %p81 = scmp.ne.s32.totalorder %s70, %s71
      %p82 = scmp.eq.s32.totalorder %s22, 0
      %p83 = por %p81, %p82
      %p84 = scmp.ne.s32.totalorder %s70, %s71
      %p85 = scmp.eq.s32.totalorder %s23, 1
      %p86 = por %p84, %p85
      %p88 = scmp.ne.s32.totalorder %s71, %s87
      %p89 = scmp.eq.s32.totalorder %s23, 0
      %p90 = por %p88, %p89
      %s91 = ssub.s32 %s24, %s36
      %s92 = ssub.s32 %s25, %s32
      %s93 = sor.u32 %s91, %s92
      %p94 = scmp.eq.s32.totalorder %s93, 0
      %s96 = sadd.s32 %s95, 1
      %s97 = scalar_select %p94, %s95, %s96
      %p100 = pneg %p94
      %p101 = scmp.eq.s32.totalorder %s17, 1
      %p102 = por %p100, %p101
      %p103 = scmp.ne.s32.totalorder %s95, %s98
      %p104 = scmp.eq.s32.totalorder %s17, 0
      %p105 = por %p103, %p104
      %p106 = scmp.ne.s32.totalorder %s95, %s98
      %p107 = scmp.eq.s32.totalorder %s22, 1
      %p108 = por %p106, %p107
      %p109 = scmp.ne.s32.totalorder %s98, %s99
      %p110 = scmp.eq.s32.totalorder %s22, 0
      %p111 = por %p109, %p110
      %p112 = scmp.ne.s32.totalorder %s98, %s99
      %p113 = scmp.eq.s32.totalorder %s23, 1
      %p114 = por %p112, %p113
      %p116 = scmp.ne.s32.totalorder %s99, %s115
      %p117 = scmp.eq.s32.totalorder %s23, 0
      %p118 = por %p116, %p117
      %p119 = scmp.le.s32.totalorder 1, %s17
      %p120 = scmp.lt.s32.totalorder %s17, 3
      %p121 = pnand %p119, %p120
      %p122 = pneg %p121
      // Predicated region
      $region9: #{tpu_custom_call.1} parent=5 // pred_check
        _
      $region10: #{tpu_custom_call.1} parent=5 // pred_check_branch
        %124 = sbr.rel (%p121) target = $region12
      $region11: #{tpu_custom_call.1} parent=5 // pred_region
        %s125 = ssub.s32 %s17, 1
      $region12: #{tpu_custom_call.1} parent=5 // pred_fallthru
        _
      %p126 = scmp.lt.s32.totalorder %s17, 2
      // Predicated region
      $region13: #{tpu_custom_call.1} parent=5 // pred_check
        %p127 = pneg %p126
      $region14: #{tpu_custom_call.1} parent=5 // pred_check_branch
        %129 = sbr.rel (%p127) target = $region16
      $region15: #{tpu_custom_call.1} parent=5 // pred_region
        // Predicated region
        $region17: #{tpu_custom_call.1} parent=15 // pred_check
          %p130 = pneg %p49
        $region18: #{tpu_custom_call.1} parent=15 // pred_check_branch
          %132 = sbr.rel (%p130) target = $region20
        $region19: #{tpu_custom_call.1} parent=15 // pred_region
          %s133 = sand.u32 %s39, 1
          %s134 = scalar_lea.sflag [#allocation3], %s133
          %s135 = sand.u32 %s39, 1
          %s136 = smul.addr %s135, 2
          %s137 = scalar_lea.vmem [#allocation2], %s136
          %139 = vsyncadd %s134, 0
          %s140 = smul.addr %s24, 2
          %s141 = scalar_lea.hbm %s0, %s140
          %s143 = sshll.u32 %s141, 4
          %s144 = int_to_ptr.hbm [resolvable:$true] %s143
          %s145 = sshll.u32 %s137, 4
          %s146 = int_to_ptr.vmem [resolvable:$true] %s145
          %148 = dma.hbm_to_vmem [thread:$0]  %s144, 32, %s146, %s134
        $region20: #{tpu_custom_call.1} parent=15 // pred_fallthru
          _
        // Predicated region
        $region21: #{tpu_custom_call.1} parent=15 // pred_check
          %p149 = pneg %p77
        $region22: #{tpu_custom_call.1} parent=15 // pred_check_branch
          %151 = sbr.rel (%p149) target = $region24
        $region23: #{tpu_custom_call.1} parent=15 // pred_region
          %s152 = sand.u32 %s67, 1
          %s153 = scalar_lea.sflag [#allocation6], %s152
          %s154 = sand.u32 %s67, 1
          %s155 = smul.addr %s154, 2
          %s156 = scalar_lea.vmem [#allocation5], %s155
          %158 = vsyncadd %s153, 0
          %s159 = sadd.s32 %s25, %s24
          %s160 = smul.addr %s159, 2
          %s161 = scalar_lea.hbm %s1, %s160
          %s163 = sshll.u32 %s161, 4
          %s164 = int_to_ptr.hbm [resolvable:$true] %s163
          %s165 = sshll.u32 %s156, 4
          %s166 = int_to_ptr.vmem [resolvable:$true] %s165
          %168 = dma.hbm_to_vmem [thread:$0]  %s164, 32, %s166, %s153
        $region24: #{tpu_custom_call.1} parent=15 // pred_fallthru
          _
      $region16: #{tpu_custom_call.1} parent=5 // pred_fallthru
        _
      %p169 = scmp.le.s32.totalorder 1, %s17
      %p170 = scmp.lt.s32.totalorder %s17, 3
      %p171 = pnand %p169, %p170
      %p172 = pneg %p171
      // Predicated region
      $region25: #{tpu_custom_call.1} parent=5 // pred_check
        _
      $region26: #{tpu_custom_call.1} parent=5 // pred_check_branch
        %174 = sbr.rel (%p171) target = $region28
      $region27: #{tpu_custom_call.1} parent=5 // pred_region
        %s175 = ssub.s32 %s17, 1
        %s176 = sand.u32 %s42, 1
        %s177 = scalar_lea.sflag [#allocation3], %s176
        %s178 = sand.u32 %s42, 1
        %s179 = smul.addr %s178, 2
        %s180 = scalar_lea.vmem [#allocation2], %s179
        // Predicated region
        $region29: #{tpu_custom_call.1} parent=27 // pred_check
          %p181 = pneg %p55
        $region30: #{tpu_custom_call.1} parent=27 // pred_check_branch
          %183 = sbr.rel (%p181) target = $region32
        $region31: #{tpu_custom_call.1} parent=27 // pred_region
          %185 = dma.done %s177, 32
        $region32: #{tpu_custom_call.1} parent=27 // pred_fallthru
          _
        %s186 = sand.u32 %s70, 1
        %s187 = scalar_lea.sflag [#allocation6], %s186
        %s188 = sand.u32 %s70, 1
        %s189 = smul.addr %s188, 2
        %s190 = scalar_lea.vmem [#allocation5], %s189
        // Predicated region
        $region33: #{tpu_custom_call.1} parent=27 // pred_check
          %p191 = pneg %p83
        $region34: #{tpu_custom_call.1} parent=27 // pred_check_branch
          %193 = sbr.rel (%p191) target = $region36
        $region35: #{tpu_custom_call.1} parent=27 // pred_region
          %195 = dma.done %s187, 32
        $region36: #{tpu_custom_call.1} parent=27 // pred_fallthru
          _
        %s196 = sand.u32 %s42, 1
        %s197 = scalar_lea.sflag [#allocation3], %s196
        %s198 = sand.u32 %s42, 1
        %s199 = smul.addr %s198, 2
        %s200 = scalar_lea.vmem [#allocation2], %s199
        %p201 = pneg %p55
        %p202 = pneg %p52
        %s203 = sand.u32 %s70, 1
        %s204 = scalar_lea.sflag [#allocation6], %s203
        %s205 = sand.u32 %s70, 1
        %s206 = smul.addr %s205, 2
        %s207 = scalar_lea.vmem [#allocation5], %s206
        %p208 = pneg %p83
        %p209 = pneg %p80
        %p210 = pneg %p111
        %p211 = pneg %p108
        %s212 = sand.u32 %s98, 1
        %s213 = scalar_lea.sflag [#allocation4], %s212
        %s214 = sand.u32 %s98, 1
        %s215 = smul.addr %s214, 2
        %s216 = scalar_lea.vmem [#allocation7], %s215
        %v217 = vld [vmem:[%s180] sm:$0x1]
        %v218 = vld [vmem:[%s180 + $0x1] sm:$0x1]
        %v219 = vld [vmem:[%s190] sm:$0x3]
        %v220 = vperm.slane %v217, 0
        %v221 = vmul.f32 %v219, %v220
        %v222 = vperm.slane %v218, 0
        %v223 = vadd.f32 %v221, %v222
        %224 = vst [vmem:[%s216] sm:$0x3] %v223
        %s225 = sand.u32 %s98, 1
        %s226 = scalar_lea.sflag [#allocation4], %s225
        %s227 = sand.u32 %s98, 1
        %s228 = smul.addr %s227, 2
        %s229 = scalar_lea.vmem [#allocation7], %s228
        // Predicated region
        $region37: #{tpu_custom_call.1} parent=27 // pred_check
          %p230 = pneg %p108
        $region38: #{tpu_custom_call.1} parent=27 // pred_check_branch
          %232 = sbr.rel (%p230) target = $region40
        $region39: #{tpu_custom_call.1} parent=27 // pred_region
          %234 = vsyncadd %s226, 0
          %s235 = sadd.s32 %s27, %s26
          %s236 = smul.addr %s235, 2
          %s237 = scalar_lea.hbm %s2, %s236
          %s239 = sshll.u32 %s229, 4
          %s240 = int_to_ptr.vmem [resolvable:$true] %s239
          %s241 = sshll.u32 %s237, 4
          %s242 = int_to_ptr.hbm [resolvable:$true] %s241
          %244 = dma.vmem_to_hbm [thread:$0]  %s240, 32, %s242, %s226
        $region40: #{tpu_custom_call.1} parent=27 // pred_fallthru
          _
      $region28: #{tpu_custom_call.1} parent=5 // pred_fallthru
        _
      %p245 = scmp.le.s32.totalorder 2, %s17
      // Predicated region
      $region41: #{tpu_custom_call.1} parent=5 // pred_check
        %p246 = pneg %p245
      $region42: #{tpu_custom_call.1} parent=5 // pred_check_branch
        %248 = sbr.rel (%p246) target = $region44
      $region43: #{tpu_custom_call.1} parent=5 // pred_region
        %s249 = ssub.s32 %s17, 2
        // Predicated region
        $region45: #{tpu_custom_call.1} parent=43 // pred_check
          %p250 = pneg %p114
        $region46: #{tpu_custom_call.1} parent=43 // pred_check_branch
          %252 = sbr.rel (%p250) target = $region48
        $region47: #{tpu_custom_call.1} parent=43 // pred_region
          %s253 = sand.u32 %s99, 1
          %s254 = scalar_lea.sflag [#allocation4], %s253
          %s255 = sand.u32 %s99, 1
          %s256 = smul.addr %s255, 2
          %s257 = scalar_lea.vmem [#allocation7], %s256
          %259 = dma.done %s254, 32
        $region48: #{tpu_custom_call.1} parent=43 // pred_fallthru
          _
      $region44: #{tpu_custom_call.1} parent=5 // pred_fallthru
        _
    $region6: #{tpu_custom_call.1} parent=1 // loop_footer
      %s21 = sadd.s32 1, %s17
    $region7: #{tpu_custom_call.1} parent=1 // loop_footer_branch
      %16 = sbr.rel target = $region3
    $region8: #{tpu_custom_call.1} parent=1 // loop_exit
      _
    %260 = vsyncpa [#allocation3], 1
    %s261 = scalar_lea.sflag [#allocation3], 1
    %262 = vsyncpa %s261, 1
    %263 = vsyncpa [#allocation6], 1
    %s264 = scalar_lea.sflag [#allocation6], 1
    %265 = vsyncpa %s264, 1
    %266 = vsyncpa [#allocation4], 1
    %s267 = scalar_lea.sflag [#allocation4], 1
    %268 = vsyncpa %s267, 1

</llo_original>
